<compile_context>
chip_gen: v7x
topology: tpu7x:2x2x1
jax: 0.10.0
libtpu: 0.0.40
codegen_flags: <defaults>
</compile_context>

<pallas_src>
import functools

import jax
import jax.numpy as jnp
import numpy as np
from jax import lax
from jax.experimental import pallas as pl
from jax.experimental.pallas import tpu as pltpu


def _cnn_kernel(x_ref, weff_ref, beff_ref, gam_ref, bet_ref, wfc_ref, bfc_ref,
                o_ref, *, eps):
    # x_ref: (B, 1, C, L) -- the raw NCHW input, whole array resident in VMEM.
    B, _, C, L = x_ref.shape
    nch, KC = weff_ref.shape                 # nch = N1*d, KC = K*C
    K = KC // C
    T = L - K + 1
    inv_BT = 1.0 / float(B * T)
    inv_T = 1.0 / float(T)

    w_eff = weff_ref[...]                    # (nch, K*C), f32 or bf16 (MXU operand)
    mxu_dt = w_eff.dtype
    b_eff = beff_ref[...]                    # (nch, 1) f32 (folded conv biases)

    # Valid-time mask (built once): lane t of each length-L row is valid iff t < T.
    valid = lax.broadcasted_iota(jnp.int32, (1, L), 1) < T

    # ---- fused pointwise+depthwise conv + ReLU + masked BN partial sums -----
    psums = []                                           # per-batch sum of a
    ssum = jnp.zeros((nch, 1), jnp.float32)              # sum of a^2 over (b, t)
    for b in range(B):
        xb = x_ref[b, 0, :, :]                           # (C, L) f32, 1-2 vregs
        # im2col: row k*C + c at lane t holds x[c, (t + k) mod L]; the wrap only
        # lands in lanes t >= T, which are masked out below.
        cols = [xb] + [pltpu.roll(xb, shift=L - k, axis=1) for k in range(1, K)]
        stacked = jnp.concatenate(cols, axis=0).astype(mxu_dt)   # (K*C, L)
        # One 128-deep MXU matmul replaces pointwise conv + K-tap depthwise FIR.
        conv = jnp.dot(w_eff, stacked,
                       preferred_element_type=jnp.float32)       # (nch, L) f32
        a = jnp.maximum(conv + b_eff, 0.0)                       # bias + ReLU
        am = jnp.where(valid, a, 0.0)                            # mask BEFORE BN sums
        psums.append(jnp.sum(am, axis=1, keepdims=True))         # (nch, 1)
        ssum = ssum + jnp.sum(am * am, axis=1, keepdims=True)    # (nch, 1)

    # ---- BatchNorm (batch stats, biased variance) folded with GAP -----------
    s1 = psums[0]
    for b in range(1, B):
        s1 = s1 + psums[b]
    mean = s1 * inv_BT
    var = jnp.maximum(ssum * inv_BT - mean * mean, 0.0)   # biased var, clamped >= 0
    scale = lax.rsqrt(var + eps) * gam_ref[...]           # (nch, 1)
    shift = bet_ref[...] - mean * scale                   # (nch, 1)

    # ---- GAP + FC + LogSoftmax, single output store --------------------------
    # GAP(BN(a))[b, ch] = psum_b[ch]/T * scale[ch] + shift[ch]  (affine in psum).
    wfc = wfc_ref[...]                                    # (nch, classes)
    rows = []
    for b in range(B):
        gap_b = psums[b] * inv_T * scale + shift          # (nch, 1)
        rows.append(jnp.sum(gap_b * wfc, axis=0, keepdims=True))   # (1, classes)
    logits = jnp.concatenate(rows, axis=0) + bfc_ref[...]          # (B, classes)

    m = jnp.max(logits, axis=1, keepdims=True)
    z = logits - m
    lse = jnp.log(jnp.sum(jnp.exp(z), axis=1, keepdims=True))
    o_ref[...] = z - lse                                  # one (B, classes) store


def fold_params(params, mxu_dtype=jnp.float32):
    """One-time folding of module-shaped params into the fused-kernel form.

    In a real pipeline this runs once per parameter set (or constant-folds under
    jit); it is parameter-only work, independent of the batch.
    """
    wp, bp, wd, bd, gamma, beta, wfc, bfc = params
    N1, d, K = wd.shape
    C = wp.shape[1]
    classes = wfc.shape[-1]
    # W_eff[n*d+j, k*C+c] = wd[n,j,k] * wp[n,c]  -- fused pointwise+depthwise.
    w_eff = jnp.einsum('njk,nc->njkc', wd, wp).reshape(N1 * d, K * C)
    w_eff = w_eff.astype(mxu_dtype)
    # b_eff[n*d+j] = bp[n] * sum_k wd[n,j,k] + bd[n,j]
    b_eff = (bp.reshape(N1, 1) * jnp.sum(wd, axis=-1) + bd).reshape(N1 * d, 1)
    b_eff = b_eff.astype(jnp.float32)
    gam = gamma.reshape(N1 * d, 1).astype(jnp.float32)
    bet = beta.reshape(N1 * d, 1).astype(jnp.float32)
    wfc2 = wfc.reshape(N1 * d, classes).astype(jnp.float32)
    bfc2 = bfc.astype(jnp.float32)
    return (w_eff, b_eff, gam, bet, wfc2, bfc2)


def interpretable_cnn_forward(x_nchw, folded, eps=1e-5):
    """x_nchw: (B, 1, C, L) float32 (PyTorch NCHW layout, passed through untouched)."""
    B, _, C, L = x_nchw.shape
    w_eff, b_eff, gam, bet, wfc2, bfc2 = folded
    nch, KC = w_eff.shape
    classes = wfc2.shape[-1]

    x_f32 = x_nchw.astype(jnp.float32)
    args = (x_f32, w_eff, b_eff, gam, bet, wfc2, bfc2)
    flops = 2 * nch * KC * B * L + 10 * nch * B * L             # fused conv + epilogue
    bytes_accessed = (sum(int(a.size) * a.dtype.itemsize for a in args)
                      + B * classes * 4)
    transcendentals = B * classes + nch + B                      # exp + rsqrt + log

    kernel = functools.partial(_cnn_kernel, eps=eps)
    return pl.pallas_call(
        kernel,
        out_shape=jax.ShapeDtypeStruct((B, classes), jnp.float32),
        in_specs=[pl.BlockSpec(memory_space=pltpu.MemorySpace.VMEM)] * 7,
        out_specs=pl.BlockSpec(memory_space=pltpu.MemorySpace.VMEM),
        cost_estimate=pl.CostEstimate(flops=flops,
                                      transcendentals=transcendentals,
                                      bytes_accessed=bytes_accessed),
    )(*args)


def init_params(key, classes, sampleChannel, N1, d, kernelLength):
    """Deterministic synthetic parameters (shapes match the PyTorch module)."""
    k1, k2, k3 = jax.random.split(key, 3)
    # pointwise Conv2d weight (N1, 1, C, 1) -> (N1, C); bias (N1,) -> (N1, 1)
    wp = jax.random.normal(k1, (N1, sampleChannel), jnp.float32) * 0.1
    bp = jnp.linspace(-0.05, 0.05, N1, dtype=jnp.float32).reshape(N1, 1)
    # depthwise Conv2d weight (d*N1, 1, 1, K) -> (N1, d, K); bias -> (N1, d)
    wd = jax.random.normal(k2, (N1, d, kernelLength), jnp.float32) * 0.1
    bd = jnp.linspace(-0.02, 0.02, N1 * d, dtype=jnp.float32).reshape(N1, d)
    # BatchNorm affine params (default init)
    gamma = jnp.ones((N1, d), jnp.float32)
    beta = jnp.zeros((N1, d), jnp.float32)
    # Linear weight (classes, d*N1) -> W.T reshaped to (N1, d, classes); bias (1, classes)
    wfc = jax.random.normal(k3, (N1, d, classes), jnp.float32) * 0.1
    bfc = jnp.linspace(-0.01, 0.01, classes, dtype=jnp.float32).reshape(1, classes)
    return (wp, bp, wd, bd, gamma, beta, wfc, bfc)


def ref_forward(x_nchw, params, eps=1e-5):
    """Pure-JAX (XLA) reference of the same math, used to validate the kernel."""
    B, _, C, L = x_nchw.shape
    x = x_nchw.reshape(B, C, L).astype(jnp.float32)
    wp, bp, wd, bd, gamma, beta, wfc, bfc = params
    N1, d, K = wd.shape
    T = L - K + 1
    y1 = jnp.einsum('nc,bcl->bnl', wp, x) + bp[None]
    acc = jnp.zeros((B, N1, d, T), jnp.float32)
    for k in range(K):
        acc = acc + wd[None, :, :, k:k + 1] * y1[:, :, None, k:k + T]
    acc = acc + bd[None, :, :, None]
    a = jnp.maximum(acc, 0.0)
    mean = jnp.mean(a, axis=(0, 3), keepdims=True)
    var = jnp.mean((a - mean) ** 2, axis=(0, 3), keepdims=True)
    xn = (a - mean) * jax.lax.rsqrt(var + eps)
    xn = xn * gamma[None, :, :, None] + beta[None, :, :, None]
    gap = jnp.mean(xn, axis=3)                         # (B, N1, d)
    logits = jnp.einsum('bnd,ndc->bc', gap, wfc) + bfc
    return jax.nn.log_softmax(logits, axis=1)


if __name__ == "__main__":
    # Small shapes consistent with the module's forward:
    # batch=2, 1 input map, 8 EEG channels, 128 time samples,
    # N1=16 pointwise filters, d=2 depthwise kernels, kernel length 16, 2 classes.
    B, C, L = 2, 8, 128
    classes, N1, d, K = 2, 16, 2, 16

    key = jax.random.PRNGKey(0)
    kx, kp = jax.random.split(key)
    x = jax.random.normal(kx, (B, 1, C, L), jnp.float32)
    params = init_params(kp, classes, C, N1, d, K)
    ref = ref_forward(x, params)

    # f32 MXU path: strict fidelity to the f32 PyTorch/XLA reference.
    folded_f32 = fold_params(params, mxu_dtype=jnp.float32)
    out = jax.block_until_ready(interpretable_cnn_forward(x, folded_f32))
    assert out.shape == (B, classes)
    np.testing.assert_allclose(np.asarray(out), np.asarray(ref), atol=1e-4, rtol=1e-4)

    # bf16 MXU-operand path (single-pass MXU on v5e/v6e/v7x, f32 accumulation and
    # f32 BN/epilogue).  Fidelity to the f32 reference is ~1e-3; checked loosely.
    folded_bf16 = fold_params(params, mxu_dtype=jnp.bfloat16)
    out_bf16 = jax.block_until_ready(interpretable_cnn_forward(x, folded_bf16))
    np.testing.assert_allclose(np.asarray(out_bf16), np.asarray(ref),
                               atol=1e-2, rtol=1e-2)

    print("KERNEL_OK")
</pallas_src>

<mosaic_0001>
module attributes {stable_mosaic.version = 11 : i64} {
  func.func @_cnn_kernel(%arg0: memref<2x1x8x128xf32, #tpu.memory_space<vmem>>, %arg1: memref<32x128xf32, #tpu.memory_space<vmem>>, %arg2: memref<32x1xf32, #tpu.memory_space<vmem>>, %arg3: memref<32x1xf32, #tpu.memory_space<vmem>>, %arg4: memref<32x1xf32, #tpu.memory_space<vmem>>, %arg5: memref<32x2xf32, #tpu.memory_space<vmem>>, %arg6: memref<1x2xf32, #tpu.memory_space<vmem>>, %arg7: memref<2x2xf32, #tpu.memory_space<vmem>>) attributes {dimension_semantics = [], scalar_prefetch = 0 : i64, scratch_operands = 0 : i64, tpu.core_type = #tpu.core_type<tc>} {
    %c0 = arith.constant 0 : index
    %c0_0 = arith.constant 0 : index
    %0 = vector.load %arg1[%c0, %c0_0] : memref<32x128xf32, #tpu.memory_space<vmem>>, vector<32x128xf32>
    %c0_1 = arith.constant 0 : index
    %c0_2 = arith.constant 0 : index
    %1 = vector.load %arg2[%c0_1, %c0_2] : memref<32x1xf32, #tpu.memory_space<vmem>>, vector<32x1xf32>
    %2 = tpu.iota {dimensions = array<i32: 1>} : vector<1x128xi32>
    %c113_i32 = arith.constant 113 : i32
    %3 = vector.broadcast %c113_i32 : i32 to vector<1x128xi32>
    %4 = arith.cmpi slt, %2, %3 : vector<1x128xi32>
    %cst = arith.constant 0.000000e+00 : f32
    %5 = vector.broadcast %cst : f32 to vector<32x1xf32>
    %c0_3 = arith.constant 0 : index
    %c0_4 = arith.constant 0 : index
    %c0_5 = arith.constant 0 : index
    %c0_6 = arith.constant 0 : index
    %6 = vector.load %arg0[%c0_3, %c0_4, %c0_5, %c0_6] : memref<2x1x8x128xf32, #tpu.memory_space<vmem>>, vector<1x1x8x128xf32>
    %7 = vector.shape_cast %6 : vector<1x1x8x128xf32> to vector<8x128xf32>
    %c127_i32 = arith.constant 127 : i32
    %8 = tpu.dynamic_rotate %7 by %c127_i32 dim 1 : vector<8x128xf32>, i32 -> vector<8x128xf32>
    %c126_i32 = arith.constant 126 : i32
    %9 = tpu.dynamic_rotate %7 by %c126_i32 dim 1 : vector<8x128xf32>, i32 -> vector<8x128xf32>
    %c125_i32 = arith.constant 125 : i32
    %10 = tpu.dynamic_rotate %7 by %c125_i32 dim 1 : vector<8x128xf32>, i32 -> vector<8x128xf32>
    %c124_i32 = arith.constant 124 : i32
    %11 = tpu.dynamic_rotate %7 by %c124_i32 dim 1 : vector<8x128xf32>, i32 -> vector<8x128xf32>
    %c123_i32 = arith.constant 123 : i32
    %12 = tpu.dynamic_rotate %7 by %c123_i32 dim 1 : vector<8x128xf32>, i32 -> vector<8x128xf32>
    %c122_i32 = arith.constant 122 : i32
    %13 = tpu.dynamic_rotate %7 by %c122_i32 dim 1 : vector<8x128xf32>, i32 -> vector<8x128xf32>
    %c121_i32 = arith.constant 121 : i32
    %14 = tpu.dynamic_rotate %7 by %c121_i32 dim 1 : vector<8x128xf32>, i32 -> vector<8x128xf32>
    %c120_i32 = arith.constant 120 : i32
    %15 = tpu.dynamic_rotate %7 by %c120_i32 dim 1 : vector<8x128xf32>, i32 -> vector<8x128xf32>
    %c119_i32 = arith.constant 119 : i32
    %16 = tpu.dynamic_rotate %7 by %c119_i32 dim 1 : vector<8x128xf32>, i32 -> vector<8x128xf32>
    %c118_i32 = arith.constant 118 : i32
    %17 = tpu.dynamic_rotate %7 by %c118_i32 dim 1 : vector<8x128xf32>, i32 -> vector<8x128xf32>
    %c117_i32 = arith.constant 117 : i32
    %18 = tpu.dynamic_rotate %7 by %c117_i32 dim 1 : vector<8x128xf32>, i32 -> vector<8x128xf32>
    %c116_i32 = arith.constant 116 : i32
    %19 = tpu.dynamic_rotate %7 by %c116_i32 dim 1 : vector<8x128xf32>, i32 -> vector<8x128xf32>
    %c115_i32 = arith.constant 115 : i32
    %20 = tpu.dynamic_rotate %7 by %c115_i32 dim 1 : vector<8x128xf32>, i32 -> vector<8x128xf32>
    %c114_i32 = arith.constant 114 : i32
    %21 = tpu.dynamic_rotate %7 by %c114_i32 dim 1 : vector<8x128xf32>, i32 -> vector<8x128xf32>
    %c113_i32_7 = arith.constant 113 : i32
    %22 = tpu.dynamic_rotate %7 by %c113_i32_7 dim 1 : vector<8x128xf32>, i32 -> vector<8x128xf32>
    %23 = tpu.concatenate %7, %8, %9, %10, %11, %12, %13, %14, %15, %16, %17, %18, %19, %20, %21, %22 in 0 : vector<8x128xf32>, vector<8x128xf32>, vector<8x128xf32>, vector<8x128xf32>, vector<8x128xf32>, vector<8x128xf32>, vector<8x128xf32>, vector<8x128xf32>, vector<8x128xf32>, vector<8x128xf32>, vector<8x128xf32>, vector<8x128xf32>, vector<8x128xf32>, vector<8x128xf32>, vector<8x128xf32>, vector<8x128xf32> -> vector<128x128xf32>
    %cst_8 = arith.constant dense<0.000000e+00> : vector<32x128xf32>
    %24 = tpu.matmul %0, %23, %cst_8 {dimension_numbers = #tpu.dot_dimension_numbers<[1], [0], [0], [1], [0, 0, 1, 1], [], []>} : vector<32x128xf32>, vector<128x128xf32>, vector<32x128xf32> -> vector<32x128xf32>
    %25 = vector.broadcast %1 : vector<32x1xf32> to vector<32x128xf32>
    %26 = arith.addf %24, %25 : vector<32x128xf32>
    %cst_9 = arith.constant 0.000000e+00 : f32
    %27 = vector.broadcast %cst_9 : f32 to vector<32x128xf32>
    %28 = arith.maximumf %26, %27 : vector<32x128xf32>
    %cst_10 = arith.constant 0.000000e+00 : f32
    %29 = vector.shape_cast %4 : vector<1x128xi1> to vector<1x128xi1>
    %30 = vector.broadcast %29 : vector<1x128xi1> to vector<32x128xi1>
    %31 = vector.broadcast %cst_10 : f32 to vector<32x128xf32>
    %32 = arith.select %30, %28, %31 : vector<32x128xi1>, vector<32x128xf32>
    %cst_11 = arith.constant dense<0.000000e+00> : vector<32xf32>
    %33 = vector.multi_reduction <add>, %32, %cst_11 [1] : vector<32x128xf32> to vector<32xf32>
    %34 = vector.shape_cast %33 : vector<32xf32> to vector<32x1xf32>
    %35 = arith.mulf %32, %32 : vector<32x128xf32>
    %cst_12 = arith.constant dense<0.000000e+00> : vector<32xf32>
    %36 = vector.multi_reduction <add>, %35, %cst_12 [1] : vector<32x128xf32> to vector<32xf32>
    %37 = vector.shape_cast %36 : vector<32xf32> to vector<32x1xf32>
    %38 = arith.addf %5, %37 : vector<32x1xf32>
    %c1 = arith.constant 1 : index
    %c0_13 = arith.constant 0 : index
    %c0_14 = arith.constant 0 : index
    %c0_15 = arith.constant 0 : index
    %39 = vector.load %arg0[%c1, %c0_13, %c0_14, %c0_15] : memref<2x1x8x128xf32, #tpu.memory_space<vmem>>, vector<1x1x8x128xf32>
    %40 = vector.shape_cast %39 : vector<1x1x8x128xf32> to vector<8x128xf32>
    %c127_i32_16 = arith.constant 127 : i32
    %41 = tpu.dynamic_rotate %40 by %c127_i32_16 dim 1 : vector<8x128xf32>, i32 -> vector<8x128xf32>
    %c126_i32_17 = arith.constant 126 : i32
    %42 = tpu.dynamic_rotate %40 by %c126_i32_17 dim 1 : vector<8x128xf32>, i32 -> vector<8x128xf32>
    %c125_i32_18 = arith.constant 125 : i32
    %43 = tpu.dynamic_rotate %40 by %c125_i32_18 dim 1 : vector<8x128xf32>, i32 -> vector<8x128xf32>
    %c124_i32_19 = arith.constant 124 : i32
    %44 = tpu.dynamic_rotate %40 by %c124_i32_19 dim 1 : vector<8x128xf32>, i32 -> vector<8x128xf32>
    %c123_i32_20 = arith.constant 123 : i32
    %45 = tpu.dynamic_rotate %40 by %c123_i32_20 dim 1 : vector<8x128xf32>, i32 -> vector<8x128xf32>
    %c122_i32_21 = arith.constant 122 : i32
    %46 = tpu.dynamic_rotate %40 by %c122_i32_21 dim 1 : vector<8x128xf32>, i32 -> vector<8x128xf32>
    %c121_i32_22 = arith.constant 121 : i32
    %47 = tpu.dynamic_rotate %40 by %c121_i32_22 dim 1 : vector<8x128xf32>, i32 -> vector<8x128xf32>
    %c120_i32_23 = arith.constant 120 : i32
    %48 = tpu.dynamic_rotate %40 by %c120_i32_23 dim 1 : vector<8x128xf32>, i32 -> vector<8x128xf32>
    %c119_i32_24 = arith.constant 119 : i32
    %49 = tpu.dynamic_rotate %40 by %c119_i32_24 dim 1 : vector<8x128xf32>, i32 -> vector<8x128xf32>
    %c118_i32_25 = arith.constant 118 : i32
    %50 = tpu.dynamic_rotate %40 by %c118_i32_25 dim 1 : vector<8x128xf32>, i32 -> vector<8x128xf32>
    %c117_i32_26 = arith.constant 117 : i32
    %51 = tpu.dynamic_rotate %40 by %c117_i32_26 dim 1 : vector<8x128xf32>, i32 -> vector<8x128xf32>
    %c116_i32_27 = arith.constant 116 : i32
    %52 = tpu.dynamic_rotate %40 by %c116_i32_27 dim 1 : vector<8x128xf32>, i32 -> vector<8x128xf32>
    %c115_i32_28 = arith.constant 115 : i32
    %53 = tpu.dynamic_rotate %40 by %c115_i32_28 dim 1 : vector<8x128xf32>, i32 -> vector<8x128xf32>
    %c114_i32_29 = arith.constant 114 : i32
    %54 = tpu.dynamic_rotate %40 by %c114_i32_29 dim 1 : vector<8x128xf32>, i32 -> vector<8x128xf32>
    %c113_i32_30 = arith.constant 113 : i32
    %55 = tpu.dynamic_rotate %40 by %c113_i32_30 dim 1 : vector<8x128xf32>, i32 -> vector<8x128xf32>
    %56 = tpu.concatenate %40, %41, %42, %43, %44, %45, %46, %47, %48, %49, %50, %51, %52, %53, %54, %55 in 0 : vector<8x128xf32>, vector<8x128xf32>, vector<8x128xf32>, vector<8x128xf32>, vector<8x128xf32>, vector<8x128xf32>, vector<8x128xf32>, vector<8x128xf32>, vector<8x128xf32>, vector<8x128xf32>, vector<8x128xf32>, vector<8x128xf32>, vector<8x128xf32>, vector<8x128xf32>, vector<8x128xf32>, vector<8x128xf32> -> vector<128x128xf32>
    %cst_31 = arith.constant dense<0.000000e+00> : vector<32x128xf32>
    %57 = tpu.matmul %0, %56, %cst_31 {dimension_numbers = #tpu.dot_dimension_numbers<[1], [0], [0], [1], [0, 0, 1, 1], [], []>} : vector<32x128xf32>, vector<128x128xf32>, vector<32x128xf32> -> vector<32x128xf32>
    %58 = vector.broadcast %1 : vector<32x1xf32> to vector<32x128xf32>
    %59 = arith.addf %57, %58 : vector<32x128xf32>
    %cst_32 = arith.constant 0.000000e+00 : f32
    %60 = vector.broadcast %cst_32 : f32 to vector<32x128xf32>
    %61 = arith.maximumf %59, %60 : vector<32x128xf32>
    %cst_33 = arith.constant 0.000000e+00 : f32
    %62 = vector.shape_cast %4 : vector<1x128xi1> to vector<1x128xi1>
    %63 = vector.broadcast %62 : vector<1x128xi1> to vector<32x128xi1>
    %64 = vector.broadcast %cst_33 : f32 to vector<32x128xf32>
    %65 = arith.select %63, %61, %64 : vector<32x128xi1>, vector<32x128xf32>
    %cst_34 = arith.constant dense<0.000000e+00> : vector<32xf32>
    %66 = vector.multi_reduction <add>, %65, %cst_34 [1] : vector<32x128xf32> to vector<32xf32>
    %67 = vector.shape_cast %66 : vector<32xf32> to vector<32x1xf32>
    %68 = arith.mulf %65, %65 : vector<32x128xf32>
    %cst_35 = arith.constant dense<0.000000e+00> : vector<32xf32>
    %69 = vector.multi_reduction <add>, %68, %cst_35 [1] : vector<32x128xf32> to vector<32xf32>
    %70 = vector.shape_cast %69 : vector<32xf32> to vector<32x1xf32>
    %71 = arith.addf %38, %70 : vector<32x1xf32>
    %72 = arith.addf %34, %67 : vector<32x1xf32>
    %cst_36 = arith.constant 0.00442477874 : f32
    %73 = vector.broadcast %cst_36 : f32 to vector<32x1xf32>
    %74 = arith.mulf %72, %73 : vector<32x1xf32>
    %cst_37 = arith.constant 0.00442477874 : f32
    %75 = vector.broadcast %cst_37 : f32 to vector<32x1xf32>
    %76 = arith.mulf %71, %75 : vector<32x1xf32>
    %77 = arith.mulf %74, %74 : vector<32x1xf32>
    %78 = arith.subf %76, %77 : vector<32x1xf32>
    %cst_38 = arith.constant 0.000000e+00 : f32
    %79 = vector.broadcast %cst_38 : f32 to vector<32x1xf32>
    %80 = arith.maximumf %78, %79 : vector<32x1xf32>
    %cst_39 = arith.constant 9.99999974E-6 : f32
    %81 = vector.broadcast %cst_39 : f32 to vector<32x1xf32>
    %82 = arith.addf %80, %81 : vector<32x1xf32>
    %83 = math.rsqrt %82 : vector<32x1xf32>
    %c0_40 = arith.constant 0 : index
    %c0_41 = arith.constant 0 : index
    %84 = vector.load %arg3[%c0_40, %c0_41] : memref<32x1xf32, #tpu.memory_space<vmem>>, vector<32x1xf32>
    %85 = arith.mulf %83, %84 : vector<32x1xf32>
    %c0_42 = arith.constant 0 : index
    %c0_43 = arith.constant 0 : index
    %86 = vector.load %arg4[%c0_42, %c0_43] : memref<32x1xf32, #tpu.memory_space<vmem>>, vector<32x1xf32>
    %87 = arith.mulf %74, %85 : vector<32x1xf32>
    %88 = arith.subf %86, %87 : vector<32x1xf32>
    %c0_44 = arith.constant 0 : index
    %c0_45 = arith.constant 0 : index
    %89 = vector.load %arg5[%c0_44, %c0_45] : memref<32x2xf32, #tpu.memory_space<vmem>>, vector<32x2xf32>
    %cst_46 = arith.constant 0.00884955748 : f32
    %90 = vector.broadcast %cst_46 : f32 to vector<32x1xf32>
    %91 = arith.mulf %34, %90 : vector<32x1xf32>
    %92 = arith.mulf %91, %85 : vector<32x1xf32>
    %93 = arith.addf %92, %88 : vector<32x1xf32>
    %94 = vector.broadcast %93 : vector<32x1xf32> to vector<32x2xf32>
    %95 = arith.mulf %94, %89 : vector<32x2xf32>
    %cst_47 = arith.constant dense<0.000000e+00> : vector<2xf32>
    %96 = vector.multi_reduction <add>, %95, %cst_47 [0] : vector<32x2xf32> to vector<2xf32>
    %97 = vector.shape_cast %96 : vector<2xf32> to vector<1x2xf32>
    %cst_48 = arith.constant 0.00884955748 : f32
    %98 = vector.broadcast %cst_48 : f32 to vector<32x1xf32>
    %99 = arith.mulf %67, %98 : vector<32x1xf32>
    %100 = arith.mulf %99, %85 : vector<32x1xf32>
    %101 = arith.addf %100, %88 : vector<32x1xf32>
    %102 = vector.broadcast %101 : vector<32x1xf32> to vector<32x2xf32>
    %103 = arith.mulf %102, %89 : vector<32x2xf32>
    %cst_49 = arith.constant dense<0.000000e+00> : vector<2xf32>
    %104 = vector.multi_reduction <add>, %103, %cst_49 [0] : vector<32x2xf32> to vector<2xf32>
    %105 = vector.shape_cast %104 : vector<2xf32> to vector<1x2xf32>
    %106 = tpu.concatenate %97, %105 in 0 : vector<1x2xf32>, vector<1x2xf32> -> vector<2x2xf32>
    %c0_50 = arith.constant 0 : index
    %c0_51 = arith.constant 0 : index
    %107 = vector.load %arg6[%c0_50, %c0_51] : memref<1x2xf32, #tpu.memory_space<vmem>>, vector<1x2xf32>
    %108 = vector.broadcast %107 : vector<1x2xf32> to vector<2x2xf32>
    %109 = arith.addf %106, %108 : vector<2x2xf32>
    %cst_52 = arith.constant dense<0xFF800000> : vector<2xf32>
    %110 = vector.multi_reduction <maximumf>, %109, %cst_52 [1] : vector<2x2xf32> to vector<2xf32>
    %111 = vector.shape_cast %110 : vector<2xf32> to vector<2x1xf32>
    %112 = vector.broadcast %111 : vector<2x1xf32> to vector<2x2xf32>
    %113 = arith.subf %109, %112 : vector<2x2xf32>
    %114 = math.exp %113 : vector<2x2xf32>
    %cst_53 = arith.constant dense<0.000000e+00> : vector<2xf32>
    %115 = vector.multi_reduction <add>, %114, %cst_53 [1] : vector<2x2xf32> to vector<2xf32>
    %116 = vector.shape_cast %115 : vector<2xf32> to vector<2x1xf32>
    %117 = math.log %116 : vector<2x1xf32>
    %118 = vector.broadcast %117 : vector<2x1xf32> to vector<2x2xf32>
    %119 = arith.subf %113, %118 : vector<2x2xf32>
    %c0_54 = arith.constant 0 : index
    %c0_55 = arith.constant 0 : index
    %120 = vector.load %arg7[%c0_54, %c0_55] : memref<2x2xf32, #tpu.memory_space<vmem>>, vector<2x2xf32>
    tpu.vector_store %arg7[%c0_54, %c0_55], %119 {strides = array<i32>} : memref<2x2xf32, #tpu.memory_space<vmem>>, vector<2x2xf32>,
    return
  }
}

</mosaic_0001>

<llo_original>
// kernel: tpu_custom_call.1
$region0: #{tpu_custom_call.1}
  #allocation0 [shape = 'u32[]', space=smem, size = 0x4, offset = 0x4, fixed_abs, tag = 'smem constant byte address 0x4 - core index']
  #allocation1 [shape = 'u32[144,128]{1,0:T(1,128)}', space=vmem, size = 0x12000, scoped, tag = 'internal scratch']
  %s0 = inlined_call_operand.vmem [shape: f32[2,1,8,128], index: 0, kind: input, shape index: {}]
  %s1 = inlined_call_operand.vmem [shape: f32[32,128], index: 1, kind: input, shape index: {}]
  %s2 = inlined_call_operand.vmem [shape: f32[32,1], index: 2, kind: input, shape index: {}]
  %s3 = inlined_call_operand.vmem [shape: f32[32,1], index: 3, kind: input, shape index: {}]
  %s4 = inlined_call_operand.vmem [shape: f32[32,1], index: 4, kind: input, shape index: {}]
  %s5 = inlined_call_operand.vmem [shape: f32[32,2], index: 5, kind: input, shape index: {}]
  %s6 = inlined_call_operand.vmem [shape: f32[1,2], index: 6, kind: input, shape index: {}]
  %s7 = inlined_call_operand.hbm [shape: f32[2,2], index: 7, kind: output, shape index: {}]
  %s8 = sld [smem:[#allocation0]]
  $region38: #{tpu_custom_call.1} parent=0
    _
  %s10 = ssub.s32 1, %s8
  %s11 = scalar_select 0, %s10, %s8
  $region1: #{tpu_custom_call.1} parent=0
    #allocation2 [shape = 'u8[1024]{0}', space=vmem, size = 0x400, scoped, tag = 'output window, operand 0, single buffered']
    #allocation3 [shape = 's32[1]{0}', space=sflag, size = 0x4, scoped, tag = 'scoped memory for tpu_custom_call.1']
    %12 = vsyncpa [#allocation3], 0
    // Predicated region
    $region2: #{tpu_custom_call.1} parent=1 // pred_check
      _
    $region3: #{tpu_custom_call.1} parent=1 // pred_check_branch
      %14 = sbr.rel (0) target = $region5
    $region4: #{tpu_custom_call.1} parent=1 // pred_region
      _
    $region5: #{tpu_custom_call.1} parent=1 // pred_fallthru
      _
    // Predicated region
    $region6: #{tpu_custom_call.1} parent=1 // pred_check
      _
    $region7: #{tpu_custom_call.1} parent=1 // pred_check_branch
      %16 = sbr.rel (0) target = $region9
    $region8: #{tpu_custom_call.1} parent=1 // pred_region
      _
    $region9: #{tpu_custom_call.1} parent=1 // pred_fallthru
      _
    // Predicated region
    $region10: #{tpu_custom_call.1} parent=1 // pred_check
      _
    $region11: #{tpu_custom_call.1} parent=1 // pred_check_branch
      %18 = sbr.rel (0) target = $region13
    $region12: #{tpu_custom_call.1} parent=1 // pred_region
      _
    $region13: #{tpu_custom_call.1} parent=1 // pred_fallthru
      _
    // Predicated region
    $region14: #{tpu_custom_call.1} parent=1 // pred_check
      _
    $region15: #{tpu_custom_call.1} parent=1 // pred_check_branch
      %20 = sbr.rel (0) target = $region17
    $region16: #{tpu_custom_call.1} parent=1 // pred_region
      _
    $region17: #{tpu_custom_call.1} parent=1 // pred_fallthru
      _
    // Predicated region
    $region18: #{tpu_custom_call.1} parent=1 // pred_check
      _
    $region19: #{tpu_custom_call.1} parent=1 // pred_check_branch
      %22 = sbr.rel (0) target = $region21
    $region20: #{tpu_custom_call.1} parent=1 // pred_region
      _
    $region21: #{tpu_custom_call.1} parent=1 // pred_fallthru
      _
    // Predicated region
    $region22: #{tpu_custom_call.1} parent=1 // pred_check
      _
    $region23: #{tpu_custom_call.1} parent=1 // pred_check_branch
      %24 = sbr.rel (0) target = $region25
    $region24: #{tpu_custom_call.1} parent=1 // pred_region
      _
    $region25: #{tpu_custom_call.1} parent=1 // pred_fallthru
      _
    // Predicated region
    $region26: #{tpu_custom_call.1} parent=1 // pred_check
      _
    $region27: #{tpu_custom_call.1} parent=1 // pred_check_branch
      %26 = sbr.rel (0) target = $region29
    $region28: #{tpu_custom_call.1} parent=1 // pred_region
      _
    $region29: #{tpu_custom_call.1} parent=1 // pred_fallthru
      _
    %v27 = vld [vmem:[%s1] sm:$0xff]
    %v28 = vld [vmem:[%s1 + $0x8] sm:$0xff]
    %v29 = vld [vmem:[%s1 + $0x10] sm:$0xff]
    %v30 = vld [vmem:[%s1 + $0x18] sm:$0xff]
    %v31 = vld [vmem:[%s2] sm:$0xff]
    %v32 = vld [vmem:[%s2 + $0x8] sm:$0xff]
    %v33 = vld [vmem:[%s2 + $0x10] sm:$0xff]
    %v34 = vld [vmem:[%s2 + $0x18] sm:$0xff]
    %v35 = vlaneseq
    %v36 = vand.u32 %v35, 127
    %vm37 = vcmp.lt.s32.totalorder %v36, 113
    %v38 = vld [vmem:[%s0] sm:$0xff]
    %39 = vrot.lane.b32.xlu0 %v38, 127
    %v40 = vpop.permute.xlu0 %39
    %41 = vrot.lane.b32.xlu0 %v38, 126
    %v42 = vpop.permute.xlu0 %41
    %43 = vrot.lane.b32.xlu0 %v38, 125
    %v44 = vpop.permute.xlu0 %43
    %45 = vrot.lane.b32.xlu0 %v38, 124
    %v46 = vpop.permute.xlu0 %45
    %47 = vrot.lane.b32.xlu0 %v38, 123
    %v48 = vpop.permute.xlu0 %47
    %49 = vrot.lane.b32.xlu0 %v38, 122
    %v50 = vpop.permute.xlu0 %49
    %51 = vrot.lane.b32.xlu0 %v38, 121
    %v52 = vpop.permute.xlu0 %51
    %53 = vrot.lane.b32.xlu0 %v38, 120
    %v54 = vpop.permute.xlu0 %53
    %55 = vrot.lane.b32.xlu0 %v38, 119
    %v56 = vpop.permute.xlu0 %55
    %57 = vrot.lane.b32.xlu0 %v38, 118
    %v58 = vpop.permute.xlu0 %57
    %59 = vrot.lane.b32.xlu0 %v38, 117
    %v60 = vpop.permute.xlu0 %59
    %61 = vrot.lane.b32.xlu0 %v38, 116
    %v62 = vpop.permute.xlu0 %61
    %63 = vrot.lane.b32.xlu0 %v38, 115
    %v64 = vpop.permute.xlu0 %63
    %65 = vrot.lane.b32.xlu0 %v38, 114
    %v66 = vpop.permute.xlu0 %65
    %67 = vrot.lane.b32.xlu0 %v38, 113
    %v68 = vpop.permute.xlu0 %67
    %70 = vset.pattern.permute.xlu0 0
    %71 = vperm.xlu0 %70, %v31
    %v72 = vpop.permute.xlu0 %71
    %75 = vset.pattern.permute.xlu0 0
    %76 = vperm.xlu0 %75, %v32
    %v77 = vpop.permute.xlu0 %76
    %80 = vset.pattern.permute.xlu0 0
    %81 = vperm.xlu0 %80, %v33
    %v82 = vpop.permute.xlu0 %81
    %85 = vset.pattern.permute.xlu0 0
    %86 = vperm.xlu0 %85, %v34
    %v87 = vpop.permute.xlu0 %86
    %89 = vmatprep.subr.mxu0 0.0
    %90 = vmatpush1.msra.mxu0 %v38
    %91 = vmatprep.subr.mxu0 0.0
    %92 = vmatpush1.msra.mxu0 %v40
    %93 = vmatprep.subr.mxu0 0.0
    %94 = vmatpush1.msra.mxu0 %v42
    %95 = vmatprep.subr.mxu0 0.0
    %96 = vmatpush1.msra.mxu0 %v44
    %97 = vmatprep.subr.mxu0 0.0
    %98 = vmatpush1.msra.mxu0 %v46
    %99 = vmatprep.subr.mxu0 0.0
    %100 = vmatpush1.msra.mxu0 %v48
    %101 = vmatprep.subr.mxu0 0.0
    %102 = vmatpush1.msra.mxu0 %v50
    %103 = vmatprep.subr.mxu0 0.0
    %104 = vmatpush1.msra.mxu0 %v52
    %105 = vmatprep.subr.mxu0 0.0
    %106 = vmatpush1.msra.mxu0 %v54
    %107 = vmatprep.subr.mxu0 0.0
    %108 = vmatpush1.msra.mxu0 %v56
    %109 = vmatprep.subr.mxu0 0.0
    %110 = vmatpush1.msra.mxu0 %v58
    %111 = vmatprep.subr.mxu0 0.0
    %112 = vmatpush1.msra.mxu0 %v60
    %113 = vmatprep.subr.mxu0 0.0
    %114 = vmatpush1.msra.mxu0 %v62
    %115 = vmatprep.subr.mxu0 0.0
    %116 = vmatpush1.msra.mxu0 %v64
    %117 = vmatprep.subr.mxu0 0.0
    %118 = vmatpush1.msra.mxu0 %v66
    %119 = vmatprep.subr.mxu0 0.0
    %120 = vmatpush1.msra.mxu0 %v68
    %121 = vmatprep.subr.mxu0 0.0
    %122 = vmatpush1.msra.mxu0 0.0
    %123 = vmatprep.subr.mxu0 0.0
    %124 = vmatpush1.msra.mxu0 0.0
    %125 = vmatprep.subr.mxu0 0.0
    %126 = vmatpush1.msra.mxu0 0.0
    %127 = vmatprep.subr.mxu0 0.0
    %128 = vmatpush1.msra.mxu0 0.0
    %129 = vmatprep.subr.mxu0 0.0
    %130 = vmatpush1.msra.mxu0 0.0
    %131 = vmatprep.subr.mxu0 0.0
    %132 = vmatpush1.msra.mxu0 0.0
    %133 = vmatprep.subr.mxu0 0.0
    %134 = vmatpush1.msra.mxu0 0.0
    %135 = vmatprep.subr.mxu0 0.0
    %136 = vmatpush1.msra.mxu0 0.0
    %137 = vmatprep.subr.mxu0 0.0
    %138 = vmatpush1.msra.mxu0 0.0
    %139 = vmatprep.subr.mxu0 0.0
    %140 = vmatpush1.msra.mxu0 0.0
    %141 = vmatprep.subr.mxu0 0.0
    %142 = vmatpush1.msra.mxu0 0.0
    %143 = vmatprep.subr.mxu0 0.0
    %144 = vmatpush1.msra.mxu0 0.0
    %145 = vmatprep.subr.mxu0 0.0
    %146 = vmatpush1.msra.mxu0 0.0
    %147 = vmatprep.subr.mxu0 0.0
    %148 = vmatpush1.msra.mxu0 0.0
    %149 = vmatprep.subr.mxu0 0.0
    %150 = vmatpush1.msra.mxu0 0.0
    %151 = vmatprep.subr.mxu0 0.0
    %152 = vmatpush1.msra.mxu0 0.0
    %153 = vmatprep.mubr.f32.mxu0 0.0
    %154 = vmatmul.mubr.f32.gmra.mrb[0].mxu0 %v27
    %v155 = vpop.f32.mrb[0].mxu0
    %v156 = vadd.f32 %v72, %v155
    %v157 = vpop.f32.mrb[0].mxu0
    %158 = vmatprep.mubr.f32.mxu0 0.0
    %159 = vmatmul.mubr.f32.gmra.mrb[0].mxu0 %v28
    %v160 = vpop.f32.mrb[0].mxu0
    %v161 = vadd.f32 %v77, %v160
    %v162 = vpop.f32.mrb[0].mxu0
    %163 = vmatprep.mubr.f32.mxu0 0.0
    %164 = vmatmul.mubr.f32.gmra.mrb[0].mxu0 %v29
    %v165 = vpop.f32.mrb[0].mxu0
    %v166 = vadd.f32 %v82, %v165
    %v167 = vpop.f32.mrb[0].mxu0
    %168 = vmatprep.mubr.f32.mxu0 0.0
    %169 = vmatmul.mubr.f32.gmra.mrb[0].mxu0 %v30
    %v170 = vpop.f32.mrb[0].mxu0
    %v171 = vadd.f32 %v87, %v170
    %v172 = vpop.f32.mrb[0].mxu0
    %173 = vdwg.mxu0
    %v174 = vmax.f32 %v156, 0.0
    %v175 = vmax.f32 %v161, 0.0
    %v176 = vmax.f32 %v166, 0.0
    %v177 = vmax.f32 %v171, 0.0
    %v178 = vsel %vm37, 1, 0
    %vm179 = vcmp.eq.s32.totalorder %v178, 1
    %v180 = vsel %vm179, %v174, 0.0
    %v181 = vsel %vm179, %v175, 0.0
    %v182 = vsel %vm179, %v176, 0.0
    %v183 = vsel %vm179, %v177, 0.0
    %184 = vadd.xlane.f32.xlu0 %v180
    %v185 = vpop.xlane.xlu0 %184
    %186 = vadd.xlane.f32.xlu0 %v181
    %v187 = vpop.xlane.xlu0 %186
    %188 = vadd.xlane.f32.xlu0 %v182
    %v189 = vpop.xlane.xlu0 %188
    %190 = vadd.xlane.f32.xlu0 %v183
    %v191 = vpop.xlane.xlu0 %190
    %v192 = vmul.f32 %v180, %v180
    %v193 = vmul.f32 %v181, %v181
    %v194 = vmul.f32 %v182, %v182
    %v195 = vmul.f32 %v183, %v183
    %196 = vadd.xlane.f32.xlu0 %v192
    %v197 = vpop.xlane.xlu0 %196
    %198 = vadd.xlane.f32.xlu0 %v193
    %v199 = vpop.xlane.xlu0 %198
    %200 = vadd.xlane.f32.xlu0 %v194
    %v201 = vpop.xlane.xlu0 %200
    %202 = vadd.xlane.f32.xlu0 %v195
    %v203 = vpop.xlane.xlu0 %202
    %v204 = vadd.f32 %v197, 0.0
    %v205 = vadd.f32 %v199, 0.0
    %v206 = vadd.f32 %v201, 0.0
    %v207 = vadd.f32 %v203, 0.0
    %s208 = scalar_lea.vmem %s0, 8
    %v209 = vld [vmem:[%s208] sm:$0xff]
    %210 = vrot.lane.b32.xlu0 %v209, 127
    %v211 = vpop.permute.xlu0 %210
    %212 = vrot.lane.b32.xlu0 %v209, 126
    %v213 = vpop.permute.xlu0 %212
    %214 = vrot.lane.b32.xlu0 %v209, 125
    %v215 = vpop.permute.xlu0 %214
    %216 = vrot.lane.b32.xlu0 %v209, 124
    %v217 = vpop.permute.xlu0 %216
    %218 = vrot.lane.b32.xlu0 %v209, 123
    %v219 = vpop.permute.xlu0 %218
    %220 = vrot.lane.b32.xlu0 %v209, 122
    %v221 = vpop.permute.xlu0 %220
    %222 = vrot.lane.b32.xlu0 %v209, 121
    %v223 = vpop.permute.xlu0 %222
    %224 = vrot.lane.b32.xlu0 %v209, 120
    %v225 = vpop.permute.xlu0 %224
    %226 = vrot.lane.b32.xlu0 %v209, 119
    %v227 = vpop.permute.xlu0 %226
    %228 = vrot.lane.b32.xlu0 %v209, 118
    %v229 = vpop.permute.xlu0 %228
    %230 = vrot.lane.b32.xlu0 %v209, 117
    %v231 = vpop.permute.xlu0 %230
    %232 = vrot.lane.b32.xlu0 %v209, 116
    %v233 = vpop.permute.xlu0 %232
    %234 = vrot.lane.b32.xlu0 %v209, 115
    %v235 = vpop.permute.xlu0 %234
    %236 = vrot.lane.b32.xlu0 %v209, 114
    %v237 = vpop.permute.xlu0 %236
    %238 = vrot.lane.b32.xlu0 %v209, 113
    %v239 = vpop.permute.xlu0 %238
    %240 = vmatprep.subr.mxu0 0.0
    %241 = vmatpush1.msra.mxu0 %v209
    %242 = vmatprep.subr.mxu0 0.0
    %243 = vmatpush1.msra.mxu0 %v211
    %244 = vmatprep.subr.mxu0 0.0
    %245 = vmatpush1.msra.mxu0 %v213
    %246 = vmatprep.subr.mxu0 0.0
    %247 = vmatpush1.msra.mxu0 %v215
    %248 = vmatprep.subr.mxu0 0.0
    %249 = vmatpush1.msra.mxu0 %v217
    %250 = vmatprep.subr.mxu0 0.0
    %251 = vmatpush1.msra.mxu0 %v219
    %252 = vmatprep.subr.mxu0 0.0
    %253 = vmatpush1.msra.mxu0 %v221
    %254 = vmatprep.subr.mxu0 0.0
    %255 = vmatpush1.msra.mxu0 %v223
    %256 = vmatprep.subr.mxu0 0.0
    %257 = vmatpush1.msra.mxu0 %v225
    %258 = vmatprep.subr.mxu0 0.0
    %259 = vmatpush1.msra.mxu0 %v227
    %260 = vmatprep.subr.mxu0 0.0
    %261 = vmatpush1.msra.mxu0 %v229
    %262 = vmatprep.subr.mxu0 0.0
    %263 = vmatpush1.msra.mxu0 %v231
    %264 = vmatprep.subr.mxu0 0.0
    %265 = vmatpush1.msra.mxu0 %v233
    %266 = vmatprep.subr.mxu0 0.0
    %267 = vmatpush1.msra.mxu0 %v235
    %268 = vmatprep.subr.mxu0 0.0
    %269 = vmatpush1.msra.mxu0 %v237
    %270 = vmatprep.subr.mxu0 0.0
    %271 = vmatpush1.msra.mxu0 %v239
    %272 = vmatprep.subr.mxu0 0.0
    %273 = vmatpush1.msra.mxu0 0.0
    %274 = vmatprep.subr.mxu0 0.0
    %275 = vmatpush1.msra.mxu0 0.0
    %276 = vmatprep.subr.mxu0 0.0
    %277 = vmatpush1.msra.mxu0 0.0
    %278 = vmatprep.subr.mxu0 0.0
    %279 = vmatpush1.msra.mxu0 0.0
    %280 = vmatprep.subr.mxu0 0.0
    %281 = vmatpush1.msra.mxu0 0.0
    %282 = vmatprep.subr.mxu0 0.0
    %283 = vmatpush1.msra.mxu0 0.0
    %284 = vmatprep.subr.mxu0 0.0
    %285 = vmatpush1.msra.mxu0 0.0
    %286 = vmatprep.subr.mxu0 0.0
    %287 = vmatpush1.msra.mxu0 0.0
    %288 = vmatprep.subr.mxu0 0.0
    %289 = vmatpush1.msra.mxu0 0.0
    %290 = vmatprep.subr.mxu0 0.0
    %291 = vmatpush1.msra.mxu0 0.0
    %292 = vmatprep.subr.mxu0 0.0
    %293 = vmatpush1.msra.mxu0 0.0
    %294 = vmatprep.subr.mxu0 0.0
    %295 = vmatpush1.msra.mxu0 0.0
    %296 = vmatprep.subr.mxu0 0.0
    %297 = vmatpush1.msra.mxu0 0.0
    %298 = vmatprep.subr.mxu0 0.0
    %299 = vmatpush1.msra.mxu0 0.0
    %300 = vmatprep.subr.mxu0 0.0
    %301 = vmatpush1.msra.mxu0 0.0
    %302 = vmatprep.subr.mxu0 0.0
    %303 = vmatpush1.msra.mxu0 0.0
    %304 = vmatprep.mubr.f32.mxu0 0.0
    %305 = vmatmul.mubr.f32.gmra.mrb[0].mxu0 %v27
    %v306 = vpop.f32.mrb[0].mxu0
    %v307 = vadd.f32 %v72, %v306
    %v308 = vpop.f32.mrb[0].mxu0
    %309 = vmatprep.mubr.f32.mxu0 0.0
    %310 = vmatmul.mubr.f32.gmra.mrb[0].mxu0 %v28
    %v311 = vpop.f32.mrb[0].mxu0
    %v312 = vadd.f32 %v77, %v311
    %v313 = vpop.f32.mrb[0].mxu0
    %314 = vmatprep.mubr.f32.mxu0 0.0
    %315 = vmatmul.mubr.f32.gmra.mrb[0].mxu0 %v29
    %v316 = vpop.f32.mrb[0].mxu0
    %v317 = vadd.f32 %v82, %v316
    %v318 = vpop.f32.mrb[0].mxu0
    %319 = vmatprep.mubr.f32.mxu0 0.0
    %320 = vmatmul.mubr.f32.gmra.mrb[0].mxu0 %v30
    %v321 = vpop.f32.mrb[0].mxu0
    %v322 = vadd.f32 %v87, %v321
    %v323 = vpop.f32.mrb[0].mxu0
    %324 = vdwg.mxu0
    %v325 = vmax.f32 %v307, 0.0
    %v326 = vmax.f32 %v312, 0.0
    %v327 = vmax.f32 %v317, 0.0
    %v328 = vmax.f32 %v322, 0.0
    %v329 = vsel %vm179, %v325, 0.0
    %v330 = vsel %vm179, %v326, 0.0
    %v331 = vsel %vm179, %v327, 0.0
    %v332 = vsel %vm179, %v328, 0.0
    %333 = vadd.xlane.f32.xlu0 %v329
    %v334 = vpop.xlane.xlu0 %333
    %335 = vadd.xlane.f32.xlu0 %v330
    %v336 = vpop.xlane.xlu0 %335
    %337 = vadd.xlane.f32.xlu0 %v331
    %v338 = vpop.xlane.xlu0 %337
    %339 = vadd.xlane.f32.xlu0 %v332
    %v340 = vpop.xlane.xlu0 %339
    %v341 = vmul.f32 %v329, %v329
    %v342 = vmul.f32 %v330, %v330
    %v343 = vmul.f32 %v331, %v331
    %v344 = vmul.f32 %v332, %v332
    %345 = vadd.xlane.f32.xlu0 %v341
    %v346 = vpop.xlane.xlu0 %345
    %347 = vadd.xlane.f32.xlu0 %v342
    %v348 = vpop.xlane.xlu0 %347
    %349 = vadd.xlane.f32.xlu0 %v343
    %v350 = vpop.xlane.xlu0 %349
    %351 = vadd.xlane.f32.xlu0 %v344
    %v352 = vpop.xlane.xlu0 %351
    %v353 = vadd.f32 %v204, %v346
    %v354 = vadd.f32 %v205, %v348
    %v355 = vadd.f32 %v206, %v350
    %v356 = vadd.f32 %v207, %v352
    %v357 = vadd.f32 %v185, %v334
    %v358 = vadd.f32 %v187, %v336
    %v359 = vadd.f32 %v189, %v338
    %v360 = vadd.f32 %v191, %v340
    %v361 = vmul.f32 %v357, 0.0044247787
    %v362 = vmul.f32 %v358, 0.0044247787
    %v363 = vmul.f32 %v359, 0.0044247787
    %v364 = vmul.f32 %v360, 0.0044247787
    %v365 = vmul.f32 %v353, 0.0044247787
    %v366 = vmul.f32 %v354, 0.0044247787
    %v367 = vmul.f32 %v355, 0.0044247787
    %v368 = vmul.f32 %v356, 0.0044247787
    %v369 = vmul.f32 %v361, %v361
    %v370 = vmul.f32 %v362, %v362
    %v371 = vmul.f32 %v363, %v363
    %v372 = vmul.f32 %v364, %v364
    %v373 = vsub.f32 %v365, %v369
    %v374 = vsub.f32 %v366, %v370
    %v375 = vsub.f32 %v367, %v371
    %v376 = vsub.f32 %v368, %v372
    %v377 = vmax.f32 %v373, 0.0
    %v378 = vmax.f32 %v374, 0.0
    %v379 = vmax.f32 %v375, 0.0
    %v380 = vmax.f32 %v376, 0.0
    %v381 = vadd.f32 %v377, 1e-05
    %v382 = vadd.f32 %v378, 1e-05
    %v383 = vadd.f32 %v379, 1e-05
    %v384 = vadd.f32 %v380, 1e-05
    %v385 = vrsqrt.pop %v381
    %v386 = vrsqrt.pop %v382
    %v387 = vrsqrt.pop %v383
    %v388 = vrsqrt.pop %v384
    %v389 = vld [vmem:[%s3] sm:$0xff]
    %v390 = vld [vmem:[%s3 + $0x8] sm:$0xff]
    %v391 = vld [vmem:[%s3 + $0x10] sm:$0xff]
    %v392 = vld [vmem:[%s3 + $0x18] sm:$0xff]
    %v393 = vmul.f32 %v385, %v389
    %v394 = vmul.f32 %v386, %v390
    %v395 = vmul.f32 %v387, %v391
    %v396 = vmul.f32 %v388, %v392
    %v397 = vld [vmem:[%s4] sm:$0xff]
    %v398 = vld [vmem:[%s4 + $0x8] sm:$0xff]
    %v399 = vld [vmem:[%s4 + $0x10] sm:$0xff]
    %v400 = vld [vmem:[%s4 + $0x18] sm:$0xff]
    %v401 = vmul.f32 %v361, %v393
    %v402 = vmul.f32 %v362, %v394
    %v403 = vmul.f32 %v363, %v395
    %v404 = vmul.f32 %v364, %v396
    %v405 = vsub.f32 %v397, %v401
    %v406 = vsub.f32 %v398, %v402
    %v407 = vsub.f32 %v399, %v403
    %v408 = vsub.f32 %v400, %v404
    %v409 = vld [vmem:[%s5] sm:$0xff]
    %v410 = vld [vmem:[%s5 + $0x8] sm:$0xff]
    %v411 = vld [vmem:[%s5 + $0x10] sm:$0xff]
    %v412 = vld [vmem:[%s5 + $0x18] sm:$0xff]
    %v413 = vmul.f32 %v185, 0.0088495575
    %v414 = vmul.f32 %v187, 0.0088495575
    %v415 = vmul.f32 %v189, 0.0088495575
    %v416 = vmul.f32 %v191, 0.0088495575
    %v417 = vmul.f32 %v413, %v393
    %v418 = vmul.f32 %v414, %v394
    %v419 = vmul.f32 %v415, %v395
    %v420 = vmul.f32 %v416, %v396
    %v421 = vadd.f32 %v417, %v405
    %v422 = vadd.f32 %v418, %v406
    %v423 = vadd.f32 %v419, %v407
    %v424 = vadd.f32 %v420, %v408
    %426 = vset.pattern.permute.xlu0 0
    %427 = vperm.xlu0 %426, %v421
    %v428 = vpop.permute.xlu0 %427
    %431 = vset.pattern.permute.xlu0 0
    %432 = vperm.xlu0 %431, %v422
    %v433 = vpop.permute.xlu0 %432
    %436 = vset.pattern.permute.xlu0 0
    %437 = vperm.xlu0 %436, %v423
    %v438 = vpop.permute.xlu0 %437
    %441 = vset.pattern.permute.xlu0 0
    %442 = vperm.xlu0 %441, %v424
    %v443 = vpop.permute.xlu0 %442
    %v445 = vmul.f32 %v428, %v409
    %v446 = vmul.f32 %v433, %v410
    %v447 = vmul.f32 %v438, %v411
    %v448 = vmul.f32 %v443, %v412
    %vm449 = vcmask 15360
    %v450 = vsel %vm449, %v445, 0.0
    %v451 = vsel %vm449, %v446, 0.0
    %v452 = vadd.f32 %v450, %v451
    %v453 = vsel %vm449, %v447, 0.0
    %v454 = vadd.f32 %v452, %v453
    %v455 = vsel %vm449, %v448, 0.0
    %v456 = vadd.f32 %v454, %v455
    %v457 = vrot.slane %v456, 4
    %v458 = vadd.f32 %v456, %v457
    %v459 = vrot.slane %v458, 2
    %v460 = vadd.f32 %v458, %v459
    %v461 = vrot.slane %v460, 1
    %v462 = vadd.f32 %v460, %v461
    %v463 = vmul.f32 %v334, 0.0088495575
    %v464 = vmul.f32 %v336, 0.0088495575
    %v465 = vmul.f32 %v338, 0.0088495575
    %v466 = vmul.f32 %v340, 0.0088495575
    %v467 = vmul.f32 %v463, %v393
    %v468 = vmul.f32 %v464, %v394
    %v469 = vmul.f32 %v465, %v395
    %v470 = vmul.f32 %v466, %v396
    %v471 = vadd.f32 %v467, %v405
    %v472 = vadd.f32 %v468, %v406
    %v473 = vadd.f32 %v469, %v407
    %v474 = vadd.f32 %v470, %v408
    %476 = vset.pattern.permute.xlu0 0
    %477 = vperm.xlu0 %476, %v471
    %v478 = vpop.permute.xlu0 %477
    %481 = vset.pattern.permute.xlu0 0
    %482 = vperm.xlu0 %481, %v472
    %v483 = vpop.permute.xlu0 %482
    %486 = vset.pattern.permute.xlu0 0
    %487 = vperm.xlu0 %486, %v473
    %v488 = vpop.permute.xlu0 %487
    %491 = vset.pattern.permute.xlu0 0
    %492 = vperm.xlu0 %491, %v474
    %v493 = vpop.permute.xlu0 %492
    %v495 = vmul.f32 %v478, %v409
    %v496 = vmul.f32 %v483, %v410
    %v497 = vmul.f32 %v488, %v411
    %v498 = vmul.f32 %v493, %v412
    %v499 = vsel %vm449, %v495, 0.0
    %v500 = vsel %vm449, %v496, 0.0
    %v501 = vadd.f32 %v499, %v500
    %v502 = vsel %vm449, %v497, 0.0
    %v503 = vadd.f32 %v501, %v502
    %v504 = vsel %vm449, %v498, 0.0
    %v505 = vadd.f32 %v503, %v504
    %v506 = vrot.slane %v505, 4
    %v507 = vadd.f32 %v505, %v506
    %v508 = vrot.slane %v507, 2
    %v509 = vadd.f32 %v507, %v508
    %v510 = vrot.slane %v509, 1
    %v511 = vadd.f32 %v509, %v510
    %vm512 = vcmask 1040384
    %v513 = vsel %vm512, %v462, %v511
    %v514 = vld [vmem:[%s6] sm:$0x1]
    %v516 = vlaneseq
    %v517 = vshrl.u32 %v516, 7
    %v518 = vsub.s32 0, %v517
    %v519 = vrot.slane %v514, %v518
    %v521 = vadd.f32 %v513, %v519
    %vm522 = vcmask 9216
    %v523 = vsel %vm522, %v521, -inf
    %524 = vmax.xlane.f32.xlu0 %v523
    %v525 = vpop.xlane.xlu0 %524
    %v526 = vsub.f32 %v521, %v525
    %v527 = vmul.f32 %v526, 1.442695
    %v528 = vpow.pop %v527
    %v529 = vsel %vm522, %v528, 0.0
    %530 = vadd.xlane.f32.xlu0 %v529
    %v531 = vpop.xlane.xlu0 %530
    %v532 = vlog2.pop %v531
    %v533 = vmul.f32 %v532, 0.6931472
    %v534 = vsub.f32 %v526, %v533
    %535 = vst.msk [vmem:[#allocation2] sm:$0x3] %vm522, %v534
    // Predicated region
    $region30: #{tpu_custom_call.1} parent=1 // pred_check
      _
    $region31: #{tpu_custom_call.1} parent=1 // pred_check_branch
      %537 = sbr.rel (0) target = $region33
    $region32: #{tpu_custom_call.1} parent=1 // pred_region
      %s539 = ssub.s32 32, 32
      %540 = vsyncadd [#allocation3], %s539
      %s542 = sshll.u32 [#allocation2], 4
      %s543 = int_to_ptr.vmem [resolvable:$true] %s542
      %545 = dma.vmem_to_hbm [thread:$0]  %s543, 32, %s7, [#allocation3]
    $region33: #{tpu_custom_call.1} parent=1 // pred_fallthru
      _
    // Predicated region
    $region34: #{tpu_custom_call.1} parent=1 // pred_check
      _
    $region35: #{tpu_custom_call.1} parent=1 // pred_check_branch
      %547 = sbr.rel (0) target = $region37
    $region36: #{tpu_custom_call.1} parent=1 // pred_region
      %548 = dma.done [#allocation3], 32
    $region37: #{tpu_custom_call.1} parent=1 // pred_fallthru
      _
    %549 = vsyncpa [#allocation3], 1

</llo_original>
